<compile_context>
chip_gen: v6e
topology: v6e:2x2x1
jax: 0.10.0
libtpu: 0.0.40
codegen_flags: <defaults>
</compile_context>

<pallas_src>
import jax
import jax.numpy as jnp
from jax.experimental import pallas as pl
from jax.experimental.pallas import tpu as pltpu


def attn_decoder_kernel(x_ref, h_ref, enc_ref, w_emb_ref, w_ref, b_ref, out_ref):
    # x_ref : (B, O)   h_ref : (B, H)   enc_ref : (T, B, H)
    # w_emb_ref : (O, H)
    # w_ref : (H, (T+H) + (T+3H) + 3H + H + O)  packed weight slab
    # b_ref : (1, 6H + T + O)                   packed bias slab
    # out_ref : (B, >=O+H+T)                    packed output slab
    B, O = x_ref.shape
    H = h_ref.shape[1]
    T = enc_ref.shape[0]
    f32 = jnp.float32

    x = x_ref[...]
    h = h_ref[...]
    enc = enc_ref[...]

    # --- packed-weight slab offsets ------------------------------------------
    oWe0, oWe1 = 0, T + H                       # [w_attn_e | w_comb_e]
    oWh0, oWh1 = oWe1, oWe1 + T + 3 * H         # [w_attn_h | w_hr | w_hz | w_hn]
    oWi0, oWi1 = oWh1, oWh1 + 3 * H             # [w_ir | w_iz | w_in]
    oWa0, oWa1 = oWi1, oWi1 + H                 # w_comb_a
    oWo0, oWo1 = oWa1, oWa1 + O                 # w_out

    # --- packed-bias slab offsets --------------------------------------------
    b_emb  = b_ref[:, 0:H]
    b_attn = b_ref[:, H:H + T]
    b_comb = b_ref[:, H + T:2 * H + T]
    b_r    = b_ref[:, 2 * H + T:3 * H + T]
    b_z    = b_ref[:, 3 * H + T:4 * H + T]
    b_in   = b_ref[:, 4 * H + T:5 * H + T]
    b_hn   = b_ref[:, 5 * H + T:6 * H + T]
    b_out  = b_ref[:, 6 * H + T:6 * H + T + O]

    # ---- embedding: Linear(O -> H) ------------------------------------------
    emb = jnp.dot(x, w_emb_ref[...], preferred_element_type=f32) + b_emb
    # dropout: nn.Dropout is identity at inference time.
    # TODO(synk): training-mode stochastic dropout (mask + scale) not implemented.

    # ---- fused hidden-side matmul: h @ [w_attn_h | w_hr | w_hz | w_hn] ------
    hh = jnp.dot(h, w_ref[:, oWh0:oWh1], preferred_element_type=f32)   # (B, T+3H)
    scores_h = hh[:, 0:T]
    h_r = hh[:, T:T + H]
    h_z = hh[:, T + H:T + 2 * H]
    h_n = hh[:, T + 2 * H:T + 3 * H]

    # ---- fused embedded-side matmul: emb @ [w_attn_e | w_comb_e] ------------
    eh = jnp.dot(emb, w_ref[:, oWe0:oWe1], preferred_element_type=f32)  # (B, T+H)
    scores = eh[:, 0:T] + scores_h + b_attn                             # (B, T)
    comb_e = eh[:, T:T + H]                                             # (B, H)

    # ---- softmax over T (lane axis); reciprocal on the EUP -------------------
    scores = scores - jnp.max(scores, axis=1, keepdims=True)
    es = jnp.exp(scores)
    attn_w = es * pl.reciprocal(jnp.sum(es, axis=1, keepdims=True), approx=True)

    # ---- bmm: attn_applied[b,:] = sum_t attn_w[b,t] * enc[t,b,:] -------------
    # enc stays time-major (T, B, H); reduce over the leading T axis.
    attn_applied = jnp.sum(attn_w.T[:, :, None] * enc, axis=0)          # (B, H)

    # ---- attn_combine + relu --------------------------------------------------
    comb = (comb_e
            + jnp.dot(attn_applied, w_ref[:, oWa0:oWa1], preferred_element_type=f32)
            + b_comb)
    xg = jnp.maximum(comb, 0.0)                                         # (B, H)

    # ---- GRU single step: fused input-side matmul xg @ [w_ir | w_iz | w_in] --
    gi = jnp.dot(xg, w_ref[:, oWi0:oWi1], preferred_element_type=f32)   # (B, 3H)
    r = jax.nn.sigmoid(gi[:, 0:H] + h_r + b_r)
    z = jax.nn.sigmoid(gi[:, H:2 * H] + h_z + b_z)
    n = jnp.tanh(gi[:, 2 * H:3 * H] + b_in + r * (h_n + b_hn))
    h_new = (1.0 - z) * n + z * h                                       # (B, H)

    # ---- out: Linear(H -> O) --------------------------------------------------
    out = jnp.dot(h_new, w_ref[:, oWo0:oWo1], preferred_element_type=f32) + b_out

    # ---- single packed output slab: [ out | h_new | attn_w | 0-pad ] ----------
    used = O + H + T
    out_ref[:, 0:O] = out.astype(out_ref.dtype)
    out_ref[:, O:O + H] = h_new.astype(out_ref.dtype)
    out_ref[:, O + H:used] = attn_w.astype(out_ref.dtype)
    if out_ref.shape[1] > used:
        out_ref[:, used:] = jnp.zeros((B, out_ref.shape[1] - used), out_ref.dtype)


def pack_params(p):
    """Concatenate per-layer weights/biases into 3 slabs (done once per model)."""
    w_big = jnp.concatenate(
        [p["w_attn_e"], p["w_comb_e"],                                  # W_e
         p["w_attn_h"], p["w_hr"], p["w_hz"], p["w_hn"],                # W_h
         p["w_ir"], p["w_iz"], p["w_in"],                               # W_i
         p["w_comb_a"],                                                 # W_ca
         p["w_out"]],                                                   # W_o
        axis=1)
    b_slab = jnp.concatenate(
        [p["b_emb"], p["b_attn"], p["b_comb"],
         p["b_r"], p["b_z"], p["b_in"], p["b_hn"], p["b_out"]],
        axis=1)
    return p["w_emb"], w_big, b_slab


def attn_decoder_forward(inp, hidden, encoder_outputs, packed):
    """inp: (1,B,O), hidden: (1,B,H), encoder_outputs: (T,B,H).
    Returns (output (B,O), hidden (1,B,H), attn_weights (B,T)) as in PyTorch."""
    w_emb, w_big, b_slab = packed
    x = inp[0]                    # (B, O)
    h = hidden[0]                 # (B, H)
    enc = encoder_outputs         # (T, B, H) -- no wrapper-side transpose

    B, O = x.shape
    H = h.shape[-1]
    T = enc.shape[0]
    used = O + H + T
    slab_w = max(128, ((used + 127) // 128) * 128)   # lane-padded output slab

    vmem = pl.BlockSpec(memory_space=pltpu.MemorySpace.VMEM)
    # NOTE(v7x): grid=() runs on a single TensorCore; if B ever grows, add a
    # grid over the batch axis with dimension_semantics=("parallel",).
    slab = pl.pallas_call(
        attn_decoder_kernel,
        out_shape=jax.ShapeDtypeStruct((B, slab_w), jnp.float32),
        in_specs=[vmem] * 6,
        out_specs=vmem,
    )(x, h, enc, w_emb, w_big, b_slab)

    out = slab[:, 0:O]
    h_new = slab[:, O:O + H]
    attn_w = slab[:, O + H:used]
    return out, h_new[None, :, :], attn_w


def make_params(key, hidden_size, output_size, time_length):
    H, O, T = hidden_size, output_size, time_length
    keys = jax.random.split(key, 16)
    u = lambda k, shape, fan_in: jax.random.uniform(
        k, shape, jnp.float32, -1.0 / jnp.sqrt(fan_in), 1.0 / jnp.sqrt(fan_in))
    return {
        # embedding: Linear(O -> H)
        "w_emb": u(keys[0], (O, H), O), "b_emb": u(keys[1], (1, H), O),
        # attn: Linear(2H -> T), split into embedded-half and hidden-half
        "w_attn_e": u(keys[2], (H, T), 2 * H), "w_attn_h": u(keys[3], (H, T), 2 * H),
        "b_attn": u(keys[4], (1, T), 2 * H),
        # attn_combine: Linear(2H -> H), split into embedded-half and attn_applied-half
        "w_comb_e": u(keys[5], (H, H), 2 * H), "w_comb_a": u(keys[6], (H, H), 2 * H),
        "b_comb": u(keys[7], (1, H), 2 * H),
        # GRU (gate order r, z, n); b_r = b_ir + b_hr etc. folded
        "w_ir": u(keys[8], (H, H), H), "w_hr": u(keys[9], (H, H), H),
        "b_r": u(keys[10], (1, H), H),
        "w_iz": u(keys[11], (H, H), H), "w_hz": u(keys[12], (H, H), H),
        "b_z": u(keys[13], (1, H), H),
        "w_in": u(keys[14], (H, H), H), "b_in": u(keys[15], (1, H), H),
        "w_hn": u(jax.random.fold_in(key, 100), (H, H), H),
        "b_hn": u(jax.random.fold_in(key, 101), (1, H), H),
        # out: Linear(H -> O)
        "w_out": u(jax.random.fold_in(key, 102), (H, O), H),
        "b_out": u(jax.random.fold_in(key, 103), (1, O), H),
    }


def reference_forward(inp, hidden, encoder_outputs, p):
    """Pure-JAX reference mirroring the PyTorch forward (eval-mode dropout)."""
    x, h = inp[0], hidden[0]
    embedded = x @ p["w_emb"] + p["b_emb"]
    scores = embedded @ p["w_attn_e"] + h @ p["w_attn_h"] + p["b_attn"]
    attn_w = jax.nn.softmax(scores, axis=1)
    enc = jnp.transpose(encoder_outputs, (1, 0, 2))
    attn_applied = jnp.einsum("bt,bth->bh", attn_w, enc)
    comb = embedded @ p["w_comb_e"] + attn_applied @ p["w_comb_a"] + p["b_comb"]
    xg = jax.nn.relu(comb)
    r = jax.nn.sigmoid(xg @ p["w_ir"] + h @ p["w_hr"] + p["b_r"])
    z = jax.nn.sigmoid(xg @ p["w_iz"] + h @ p["w_hz"] + p["b_z"])
    n = jnp.tanh(xg @ p["w_in"] + p["b_in"] + r * (h @ p["w_hn"] + p["b_hn"]))
    h_new = (1.0 - z) * n + z * h
    out = h_new @ p["w_out"] + p["b_out"]
    return out, h_new[None], attn_w


if __name__ == "__main__":
    B, H, O, T = 2, 32, 16, 8   # batch, hidden_size, output_size, time_length

    key = jax.random.PRNGKey(0)
    k_in, k_h, k_enc, k_p = jax.random.split(key, 4)

    inp = jax.random.normal(k_in, (1, B, O), jnp.float32)               # (seq=1, B, output_size)
    hidden = jax.random.normal(k_h, (1, B, H), jnp.float32)             # (num_layers=1, B, hidden_size)
    encoder_outputs = jax.random.normal(k_enc, (T, B, H), jnp.float32)  # (time_length, B, hidden_size)
    params = make_params(k_p, H, O, T)
    packed = pack_params(params)   # one-time host-side packing into 3 slabs

    out, h_new, attn_w = attn_decoder_forward(inp, hidden, encoder_outputs, packed)
    jax.block_until_ready((out, h_new, attn_w))

    ref_out, ref_h, ref_w = reference_forward(inp, hidden, encoder_outputs, params)
    # Tolerance relaxed to 5e-3: pl.reciprocal(approx=True) in the softmax
    # denominator (EUP estimate) introduces ~1e-3-level error vs exact division.
    assert jnp.allclose(out, ref_out, rtol=5e-3, atol=5e-3)
    assert jnp.allclose(h_new, ref_h, rtol=5e-3, atol=5e-3)
    assert jnp.allclose(attn_w, ref_w, rtol=5e-3, atol=5e-3)

    print("KERNEL_OK")
</pallas_src>

<mosaic_0001>
module attributes {stable_mosaic.version = 11 : i64} {
  func.func @attn_decoder_kernel(%arg0: memref<2x16xf32, #tpu.memory_space<vmem>>, %arg1: memref<2x32xf32, #tpu.memory_space<vmem>>, %arg2: memref<8x2x32xf32, #tpu.memory_space<vmem>>, %arg3: memref<16x32xf32, #tpu.memory_space<vmem>>, %arg4: memref<32x288xf32, #tpu.memory_space<vmem>>, %arg5: memref<1x216xf32, #tpu.memory_space<vmem>>, %arg6: memref<2x128xf32, #tpu.memory_space<vmem>>) attributes {dimension_semantics = [], scalar_prefetch = 0 : i64, scratch_operands = 0 : i64, tpu.core_type = #tpu.core_type<tc>} {
    %c0 = arith.constant 0 : index
    %c0_0 = arith.constant 0 : index
    %0 = vector.load %arg0[%c0, %c0_0] : memref<2x16xf32, #tpu.memory_space<vmem>>, vector<2x16xf32>
    %c0_1 = arith.constant 0 : index
    %c0_2 = arith.constant 0 : index
    %1 = vector.load %arg1[%c0_1, %c0_2] : memref<2x32xf32, #tpu.memory_space<vmem>>, vector<2x32xf32>
    %c0_3 = arith.constant 0 : index
    %c0_4 = arith.constant 0 : index
    %c0_5 = arith.constant 0 : index
    %2 = vector.load %arg2[%c0_3, %c0_4, %c0_5] : memref<8x2x32xf32, #tpu.memory_space<vmem>>, vector<8x2x32xf32>
    %c0_6 = arith.constant 0 : index
    %c0_7 = arith.constant 0 : index
    %3 = vector.load %arg5[%c0_6, %c0_7] : memref<1x216xf32, #tpu.memory_space<vmem>>, vector<1x32xf32>
    %c0_8 = arith.constant 0 : index
    %c32 = arith.constant 32 : index
    %4 = vector.load %arg5[%c0_8, %c32] : memref<1x216xf32, #tpu.memory_space<vmem>>, vector<1x8xf32>
    %c0_9 = arith.constant 0 : index
    %c40 = arith.constant 40 : index
    %5 = vector.load %arg5[%c0_9, %c40] : memref<1x216xf32, #tpu.memory_space<vmem>>, vector<1x32xf32>
    %c0_10 = arith.constant 0 : index
    %c72 = arith.constant 72 : index
    %6 = vector.load %arg5[%c0_10, %c72] : memref<1x216xf32, #tpu.memory_space<vmem>>, vector<1x32xf32>
    %c0_11 = arith.constant 0 : index
    %c104 = arith.constant 104 : index
    %7 = vector.load %arg5[%c0_11, %c104] : memref<1x216xf32, #tpu.memory_space<vmem>>, vector<1x32xf32>
    %c0_12 = arith.constant 0 : index
    %c136 = arith.constant 136 : index
    %8 = vector.load %arg5[%c0_12, %c136] : memref<1x216xf32, #tpu.memory_space<vmem>>, vector<1x32xf32>
    %c0_13 = arith.constant 0 : index
    %c168 = arith.constant 168 : index
    %9 = vector.load %arg5[%c0_13, %c168] : memref<1x216xf32, #tpu.memory_space<vmem>>, vector<1x32xf32>
    %c0_14 = arith.constant 0 : index
    %c200 = arith.constant 200 : index
    %10 = vector.load %arg5[%c0_14, %c200] : memref<1x216xf32, #tpu.memory_space<vmem>>, vector<1x16xf32>
    %c0_15 = arith.constant 0 : index
    %c0_16 = arith.constant 0 : index
    %11 = vector.load %arg3[%c0_15, %c0_16] : memref<16x32xf32, #tpu.memory_space<vmem>>, vector<16x32xf32>
    %cst = arith.constant dense<0.000000e+00> : vector<2x32xf32>
    %12 = tpu.matmul %0, %11, %cst {dimension_numbers = #tpu.dot_dimension_numbers<[1], [0], [0], [1], [0, 0, 1, 1], [], []>} : vector<2x16xf32>, vector<16x32xf32>, vector<2x32xf32> -> vector<2x32xf32>
    %13 = vector.broadcast %3 : vector<1x32xf32> to vector<2x32xf32>
    %14 = arith.addf %12, %13 : vector<2x32xf32>
    %c0_17 = arith.constant 0 : index
    %c40_18 = arith.constant 40 : index
    %15 = vector.load %arg4[%c0_17, %c40_18] : memref<32x288xf32, #tpu.memory_space<vmem>>, vector<32x104xf32>
    %cst_19 = arith.constant dense<0.000000e+00> : vector<2x104xf32>
    %16 = tpu.matmul %1, %15, %cst_19 {dimension_numbers = #tpu.dot_dimension_numbers<[1], [0], [0], [1], [0, 0, 1, 1], [], []>} : vector<2x32xf32>, vector<32x104xf32>, vector<2x104xf32> -> vector<2x104xf32>
    %17 = vector.extract_strided_slice %16 {offsets = [0, 0], sizes = [2, 8], strides = [1, 1]} : vector<2x104xf32> to vector<2x8xf32>
    %18 = vector.extract_strided_slice %16 {offsets = [0, 8], sizes = [2, 32], strides = [1, 1]} : vector<2x104xf32> to vector<2x32xf32>
    %19 = vector.extract_strided_slice %16 {offsets = [0, 40], sizes = [2, 32], strides = [1, 1]} : vector<2x104xf32> to vector<2x32xf32>
    %20 = vector.extract_strided_slice %16 {offsets = [0, 72], sizes = [2, 32], strides = [1, 1]} : vector<2x104xf32> to vector<2x32xf32>
    %c0_20 = arith.constant 0 : index
    %c0_21 = arith.constant 0 : index
    %21 = vector.load %arg4[%c0_20, %c0_21] : memref<32x288xf32, #tpu.memory_space<vmem>>, vector<32x40xf32>
    %cst_22 = arith.constant dense<0.000000e+00> : vector<2x40xf32>
    %22 = tpu.matmul %14, %21, %cst_22 {dimension_numbers = #tpu.dot_dimension_numbers<[1], [0], [0], [1], [0, 0, 1, 1], [], []>} : vector<2x32xf32>, vector<32x40xf32>, vector<2x40xf32> -> vector<2x40xf32>
    %23 = vector.extract_strided_slice %22 {offsets = [0, 0], sizes = [2, 8], strides = [1, 1]} : vector<2x40xf32> to vector<2x8xf32>
    %24 = arith.addf %23, %17 : vector<2x8xf32>
    %25 = vector.broadcast %4 : vector<1x8xf32> to vector<2x8xf32>
    %26 = arith.addf %24, %25 : vector<2x8xf32>
    %27 = vector.extract_strided_slice %22 {offsets = [0, 8], sizes = [2, 32], strides = [1, 1]} : vector<2x40xf32> to vector<2x32xf32>
    %cst_23 = arith.constant dense<0xFF800000> : vector<2xf32>
    %28 = vector.multi_reduction <maximumf>, %26, %cst_23 [1] : vector<2x8xf32> to vector<2xf32>
    %29 = vector.shape_cast %28 : vector<2xf32> to vector<2x1xf32>
    %30 = vector.broadcast %29 : vector<2x1xf32> to vector<2x8xf32>
    %31 = arith.subf %26, %30 : vector<2x8xf32>
    %32 = math.exp %31 : vector<2x8xf32>
    %cst_24 = arith.constant dense<0.000000e+00> : vector<2xf32>
    %33 = vector.multi_reduction <add>, %32, %cst_24 [1] : vector<2x8xf32> to vector<2xf32>
    %34 = vector.shape_cast %33 : vector<2xf32> to vector<2x1xf32>
    %35 = tpu.reciprocal %34 {approx = true} : vector<2x1xf32> -> vector<2x1xf32>
    %36 = vector.broadcast %35 : vector<2x1xf32> to vector<2x8xf32>
    %37 = arith.mulf %32, %36 : vector<2x8xf32>
    %38 = tpu.transpose %37, [1, 0] : vector<2x8xf32> -> vector<8x2xf32>
    %39 = vector.shape_cast %38 : vector<8x2xf32> to vector<8x2x1xf32>
    %40 = vector.broadcast %39 : vector<8x2x1xf32> to vector<8x2x32xf32>
    %41 = arith.mulf %40, %2 : vector<8x2x32xf32>
    %cst_25 = arith.constant dense<0.000000e+00> : vector<2x32xf32>
    %42 = vector.multi_reduction <add>, %41, %cst_25 [0] : vector<8x2x32xf32> to vector<2x32xf32>
    %c0_26 = arith.constant 0 : index
    %c240 = arith.constant 240 : index
    %43 = vector.load %arg4[%c0_26, %c240] : memref<32x288xf32, #tpu.memory_space<vmem>>, vector<32x32xf32>
    %cst_27 = arith.constant dense<0.000000e+00> : vector<2x32xf32>
    %44 = tpu.matmul %42, %43, %cst_27 {dimension_numbers = #tpu.dot_dimension_numbers<[1], [0], [0], [1], [0, 0, 1, 1], [], []>} : vector<2x32xf32>, vector<32x32xf32>, vector<2x32xf32> -> vector<2x32xf32>
    %45 = arith.addf %27, %44 : vector<2x32xf32>
    %46 = vector.broadcast %5 : vector<1x32xf32> to vector<2x32xf32>
    %47 = arith.addf %45, %46 : vector<2x32xf32>
    %cst_28 = arith.constant 0.000000e+00 : f32
    %48 = vector.broadcast %cst_28 : f32 to vector<2x32xf32>
    %49 = arith.maximumf %47, %48 : vector<2x32xf32>
    %c0_29 = arith.constant 0 : index
    %c144 = arith.constant 144 : index
    %50 = vector.load %arg4[%c0_29, %c144] : memref<32x288xf32, #tpu.memory_space<vmem>>, vector<32x96xf32>
    %cst_30 = arith.constant dense<0.000000e+00> : vector<2x96xf32>
    %51 = tpu.matmul %49, %50, %cst_30 {dimension_numbers = #tpu.dot_dimension_numbers<[1], [0], [0], [1], [0, 0, 1, 1], [], []>} : vector<2x32xf32>, vector<32x96xf32>, vector<2x96xf32> -> vector<2x96xf32>
    %52 = vector.extract_strided_slice %51 {offsets = [0, 0], sizes = [2, 32], strides = [1, 1]} : vector<2x96xf32> to vector<2x32xf32>
    %53 = arith.addf %52, %18 : vector<2x32xf32>
    %54 = vector.broadcast %6 : vector<1x32xf32> to vector<2x32xf32>
    %55 = arith.addf %53, %54 : vector<2x32xf32>
    %56 = arith.negf %55 : vector<2x32xf32>
    %57 = math.exp %56 : vector<2x32xf32>
    %cst_31 = arith.constant 1.000000e+00 : f32
    %58 = vector.broadcast %cst_31 : f32 to vector<2x32xf32>
    %59 = arith.addf %58, %57 : vector<2x32xf32>
    %60 = arith.divf %58, %59 : vector<2x32xf32>
    %61 = vector.extract_strided_slice %51 {offsets = [0, 32], sizes = [2, 32], strides = [1, 1]} : vector<2x96xf32> to vector<2x32xf32>
    %62 = arith.addf %61, %19 : vector<2x32xf32>
    %63 = vector.broadcast %7 : vector<1x32xf32> to vector<2x32xf32>
    %64 = arith.addf %62, %63 : vector<2x32xf32>
    %65 = arith.negf %64 : vector<2x32xf32>
    %66 = math.exp %65 : vector<2x32xf32>
    %cst_32 = arith.constant 1.000000e+00 : f32
    %67 = vector.broadcast %cst_32 : f32 to vector<2x32xf32>
    %68 = arith.addf %67, %66 : vector<2x32xf32>
    %69 = arith.divf %67, %68 : vector<2x32xf32>
    %70 = vector.extract_strided_slice %51 {offsets = [0, 64], sizes = [2, 32], strides = [1, 1]} : vector<2x96xf32> to vector<2x32xf32>
    %71 = vector.broadcast %8 : vector<1x32xf32> to vector<2x32xf32>
    %72 = arith.addf %70, %71 : vector<2x32xf32>
    %73 = vector.broadcast %9 : vector<1x32xf32> to vector<2x32xf32>
    %74 = arith.addf %20, %73 : vector<2x32xf32>
    %75 = arith.mulf %60, %74 : vector<2x32xf32>
    %76 = arith.addf %72, %75 : vector<2x32xf32>
    %77 = math.tanh %76 : vector<2x32xf32>
    %cst_33 = arith.constant 1.000000e+00 : f32
    %78 = vector.broadcast %cst_33 : f32 to vector<2x32xf32>
    %79 = arith.subf %78, %69 : vector<2x32xf32>
    %80 = arith.mulf %79, %77 : vector<2x32xf32>
    %81 = arith.mulf %69, %1 : vector<2x32xf32>
    %82 = arith.addf %80, %81 : vector<2x32xf32>
    %c0_34 = arith.constant 0 : index
    %c272 = arith.constant 272 : index
    %83 = vector.load %arg4[%c0_34, %c272] : memref<32x288xf32, #tpu.memory_space<vmem>>, vector<32x16xf32>
    %cst_35 = arith.constant dense<0.000000e+00> : vector<2x16xf32>
    %84 = tpu.matmul %82, %83, %cst_35 {dimension_numbers = #tpu.dot_dimension_numbers<[1], [0], [0], [1], [0, 0, 1, 1], [], []>} : vector<2x32xf32>, vector<32x16xf32>, vector<2x16xf32> -> vector<2x16xf32>
    %85 = vector.broadcast %10 : vector<1x16xf32> to vector<2x16xf32>
    %86 = arith.addf %84, %85 : vector<2x16xf32>
    %c0_36 = arith.constant 0 : index
    %c0_37 = arith.constant 0 : index
    %87 = vector.load %arg6[%c0_36, %c0_37] : memref<2x128xf32, #tpu.memory_space<vmem>>, vector<2x16xf32>
    tpu.vector_store %arg6[%c0_36, %c0_37], %86 {strides = array<i32>} : memref<2x128xf32, #tpu.memory_space<vmem>>, vector<2x16xf32>,
    %c0_38 = arith.constant 0 : index
    %c16 = arith.constant 16 : index
    %88 = vector.load %arg6[%c0_38, %c16] : memref<2x128xf32, #tpu.memory_space<vmem>>, vector<2x32xf32>
    tpu.vector_store %arg6[%c0_38, %c16], %82 {strides = array<i32>} : memref<2x128xf32, #tpu.memory_space<vmem>>, vector<2x32xf32>,
    %c0_39 = arith.constant 0 : index
    %c48 = arith.constant 48 : index
    %89 = vector.load %arg6[%c0_39, %c48] : memref<2x128xf32, #tpu.memory_space<vmem>>, vector<2x8xf32>
    tpu.vector_store %arg6[%c0_39, %c48], %37 {strides = array<i32>} : memref<2x128xf32, #tpu.memory_space<vmem>>, vector<2x8xf32>,
    %cst_40 = arith.constant 0.000000e+00 : f32
    %90 = vector.broadcast %cst_40 : f32 to vector<2x72xf32>
    %c0_41 = arith.constant 0 : index
    %c56 = arith.constant 56 : index
    %91 = vector.load %arg6[%c0_41, %c56] : memref<2x128xf32, #tpu.memory_space<vmem>>, vector<2x72xf32>
    tpu.vector_store %arg6[%c0_41, %c56], %90 {strides = array<i32>} : memref<2x128xf32, #tpu.memory_space<vmem>>, vector<2x72xf32>,
    return
  }
}

</mosaic_0001>

<llo_original>
// kernel: tpu_custom_call.1
$region0: #{tpu_custom_call.1}
  #allocation0 [shape = 'u32[]', space=smem, size = 0x4, offset = 0x4, fixed_abs, tag = 'smem constant byte address 0x4 - core index']
  #allocation1 [shape = 'u32[144,128]{1,0:T(1,128)}', space=vmem, size = 0x12000, scoped, tag = 'internal scratch']
  %s0 = inlined_call_operand.hbm [shape: f32[2,16], index: 0, kind: input, shape index: {}]
  %s1 = inlined_call_operand.hbm [shape: f32[2,32], index: 1, kind: input, shape index: {}]
  %s2 = inlined_call_operand.hbm [shape: f32[8,2,32], index: 2, kind: input, shape index: {}]
  %s3 = inlined_call_operand.hbm [shape: f32[16,32], index: 3, kind: input, shape index: {}]
  %s4 = inlined_call_operand.hbm [shape: f32[32,288], index: 4, kind: input, shape index: {}]
  %s5 = inlined_call_operand.vmem [shape: f32[1,216], index: 5, kind: input, shape index: {}]
  %s6 = inlined_call_operand.hbm [shape: f32[2,128], index: 6, kind: output, shape index: {}]
  %s7 = sld [smem:[#allocation0]]
  $region54: #{tpu_custom_call.1} parent=0
    _
  %s9 = ssub.s32 1, %s7
  %s10 = scalar_select 0, %s9, %s7
  $region1: #{tpu_custom_call.1} parent=0
    #allocation2 [shape = 'u8[1024]{0}', space=vmem, size = 0x400, scoped, tag = 'input window, operand 0, single buffered']
    #allocation3 [shape = 's32[1]{0}', space=sflag, size = 0x4, scoped, tag = 'scoped memory for tpu_custom_call.1']
    #allocation4 [shape = 's32[1]{0}', space=sflag, size = 0x4, scoped, tag = 'scoped memory for tpu_custom_call.1']
    #allocation5 [shape = 'u8[1024]{0}', space=vmem, size = 0x400, scoped, tag = 'input window, operand 1, single buffered']
    #allocation6 [shape = 's32[1]{0}', space=sflag, size = 0x4, scoped, tag = 'scoped memory for tpu_custom_call.1']
    #allocation7 [shape = 'u8[8192]{0}', space=vmem, size = 0x2000, scoped, tag = 'input window, operand 2, single buffered']
    #allocation8 [shape = 'u8[8192]{0}', space=vmem, size = 0x2000, scoped, tag = 'input window, operand 3, single buffered']
    #allocation9 [shape = 's32[1]{0}', space=sflag, size = 0x4, scoped, tag = 'scoped memory for tpu_custom_call.1']
    #allocation10 [shape = 'u8[49152]{0}', space=vmem, size = 0xc000, scoped, tag = 'input window, operand 4, single buffered']
    #allocation11 [shape = 'u8[1024]{0}', space=vmem, size = 0x400, scoped, tag = 'output window, operand 0, single buffered']
    %11 = vsyncpa [#allocation3], 0
    %12 = vsyncpa [#allocation6], 0
    %13 = vsyncpa [#allocation9], 0
    %14 = vsyncpa [#allocation4], 0
    // Predicated region
    $region2: #{tpu_custom_call.1} parent=1 // pred_check
      _
    $region3: #{tpu_custom_call.1} parent=1 // pred_check_branch
      %16 = sbr.rel (0) target = $region5
    $region4: #{tpu_custom_call.1} parent=1 // pred_region
      %s18 = ssub.s32 32, 32
      %19 = vsyncadd [#allocation3], %s18
      %s21 = sshll.u32 [#allocation2], 4
      %s22 = int_to_ptr.vmem [resolvable:$true] %s21
      %24 = dma.hbm_to_vmem [thread:$0]  %s0, 32, %s22, [#allocation3]
    $region5: #{tpu_custom_call.1} parent=1 // pred_fallthru
      _
    // Predicated region
    $region6: #{tpu_custom_call.1} parent=1 // pred_check
      _
    $region7: #{tpu_custom_call.1} parent=1 // pred_check_branch
      %26 = sbr.rel (0) target = $region9
    $region8: #{tpu_custom_call.1} parent=1 // pred_region
      %s28 = ssub.s32 32, 32
      %29 = vsyncadd [#allocation6], %s28
      %s31 = sshll.u32 [#allocation5], 4
      %s32 = int_to_ptr.vmem [resolvable:$true] %s31
      %34 = dma.hbm_to_vmem [thread:$0]  %s1, 32, %s32, [#allocation6]
    $region9: #{tpu_custom_call.1} parent=1 // pred_fallthru
      _
    // Predicated region
    $region10: #{tpu_custom_call.1} parent=1 // pred_check
      _
    $region11: #{tpu_custom_call.1} parent=1 // pred_check_branch
      %36 = sbr.rel (0) target = $region13
    $region12: #{tpu_custom_call.1} parent=1 // pred_region
      %s38 = ssub.s32 256, 256
      %39 = vsyncadd [#allocation6], %s38
      %s40 = sshll.u32 [#allocation7], 4
      %s41 = int_to_ptr.vmem [resolvable:$true] %s40
      %46 = dma.hbm_to_vmem [thread:$0]  %s2, 256, %s41, [#allocation6], 32, 32, 2
    $region13: #{tpu_custom_call.1} parent=1 // pred_fallthru
      _
    // Predicated region
    $region14: #{tpu_custom_call.1} parent=1 // pred_check
      _
    $region15: #{tpu_custom_call.1} parent=1 // pred_check_branch
      %48 = sbr.rel (0) target = $region17
    $region16: #{tpu_custom_call.1} parent=1 // pred_region
      %s50 = ssub.s32 256, 256
      %51 = vsyncadd [#allocation9], %s50
      %s52 = sshll.u32 [#allocation8], 4
      %s53 = int_to_ptr.vmem [resolvable:$true] %s52
      %58 = dma.hbm_to_vmem [thread:$0]  %s3, 256, %s53, [#allocation9], 128, 128, 8
    $region17: #{tpu_custom_call.1} parent=1 // pred_fallthru
      _
    // Predicated region
    $region18: #{tpu_custom_call.1} parent=1 // pred_check
      _
    $region19: #{tpu_custom_call.1} parent=1 // pred_check_branch
      %60 = sbr.rel (0) target = $region21
    $region20: #{tpu_custom_call.1} parent=1 // pred_region
      %s62 = ssub.s32 1536, 1536
      %63 = vsyncadd [#allocation9], %s62
      %s64 = sshll.u32 [#allocation10], 4
      %s65 = int_to_ptr.vmem [resolvable:$true] %s64
      %70 = dma.hbm_to_vmem [thread:$0]  %s4, 1536, %s65, [#allocation9], 384, 384, 24
    $region21: #{tpu_custom_call.1} parent=1 // pred_fallthru
      _
    // Predicated region
    $region22: #{tpu_custom_call.1} parent=1 // pred_check
      _
    $region23: #{tpu_custom_call.1} parent=1 // pred_check_branch
      %72 = sbr.rel (0) target = $region25
    $region24: #{tpu_custom_call.1} parent=1 // pred_region
      _
    $region25: #{tpu_custom_call.1} parent=1 // pred_fallthru
      _
    // Predicated region
    $region26: #{tpu_custom_call.1} parent=1 // pred_check
      _
    $region27: #{tpu_custom_call.1} parent=1 // pred_check_branch
      %74 = sbr.rel (0) target = $region29
    $region28: #{tpu_custom_call.1} parent=1 // pred_region
      %75 = dma.done [#allocation3], 32
    $region29: #{tpu_custom_call.1} parent=1 // pred_fallthru
      _
    // Predicated region
    $region30: #{tpu_custom_call.1} parent=1 // pred_check
      _
    $region31: #{tpu_custom_call.1} parent=1 // pred_check_branch
      %77 = sbr.rel (0) target = $region33
    $region32: #{tpu_custom_call.1} parent=1 // pred_region
      %78 = dma.done [#allocation6], 32
    $region33: #{tpu_custom_call.1} parent=1 // pred_fallthru
      _
    // Predicated region
    $region34: #{tpu_custom_call.1} parent=1 // pred_check
      _
    $region35: #{tpu_custom_call.1} parent=1 // pred_check_branch
      %80 = sbr.rel (0) target = $region37
    $region36: #{tpu_custom_call.1} parent=1 // pred_region
      %81 = dma.done [#allocation6], 256
    $region37: #{tpu_custom_call.1} parent=1 // pred_fallthru
      _
    // Predicated region
    $region38: #{tpu_custom_call.1} parent=1 // pred_check
      _
    $region39: #{tpu_custom_call.1} parent=1 // pred_check_branch
      %83 = sbr.rel (0) target = $region41
    $region40: #{tpu_custom_call.1} parent=1 // pred_region
      %84 = dma.done [#allocation9], 256
    $region41: #{tpu_custom_call.1} parent=1 // pred_fallthru
      _
    // Predicated region
    $region42: #{tpu_custom_call.1} parent=1 // pred_check
      _
    $region43: #{tpu_custom_call.1} parent=1 // pred_check_branch
      %86 = sbr.rel (0) target = $region45
    $region44: #{tpu_custom_call.1} parent=1 // pred_region
      %87 = dma.done [#allocation9], 1536
    $region45: #{tpu_custom_call.1} parent=1 // pred_fallthru
      _
    %v88 = vld [vmem:[#allocation2] sm:$0x3]
    %v89 = vld [vmem:[#allocation5] sm:$0x3]
    %v90 = vld [vmem:[#allocation7] sm:$0x3]
    %v91 = vld [vmem:[#allocation7 + $0x2] sm:$0x3]
    %v92 = vld [vmem:[#allocation7 + $0x4] sm:$0x3]
    %v93 = vld [vmem:[#allocation7 + $0x6] sm:$0x3]
    %v94 = vld [vmem:[#allocation7 + $0x8] sm:$0x3]
    %v95 = vld [vmem:[#allocation7 + $0xa] sm:$0x3]
    %v96 = vld [vmem:[#allocation7 + $0xc] sm:$0x3]
    %v97 = vld [vmem:[#allocation7 + $0xe] sm:$0x3]
    %v98 = vld [vmem:[%s5] sm:$0x1]
    %v99 = vld [vmem:[%s5] sm:$0x3]
    %v100 = vld [vmem:[%s5 + $0x1] sm:$0x1]
    %v101 = vld [vmem:[#allocation8] sm:$0xff]
    %v102 = vld [vmem:[#allocation8 + $0x8] sm:$0xff]
    %v104 = vlaneseq
    %v105 = vshrl.u32 %v104, 7
    %v106 = vsub.s32 0, %v105
    %v107 = vrot.slane %v98, %v106
    %vm109 = vcmask 130048
    %v111 = vsel %vm109, %v88, 0
    %113 = vmatprep.subr.mxu0 0.0
    %114 = vmatpush1.msra.mxu0 0.0
    %115 = vmatprep.subr.mxu0 0.0
    %116 = vmatpush1.msra.mxu0 0.0
    %117 = vmatprep.subr.mxu0 0.0
    %118 = vmatpush1.msra.mxu0 0.0
    %119 = vmatprep.subr.mxu0 0.0
    %120 = vmatpush1.msra.mxu0 0.0
    %121 = vmatprep.subr.mxu0 0.0
    %122 = vmatpush1.msra.mxu0 0.0
    %123 = vmatprep.subr.mxu0 0.0
    %124 = vmatpush1.msra.mxu0 0.0
    %125 = vmatprep.subr.mxu0 0.0
    %126 = vmatpush1.msra.mxu0 0.0
    %127 = vmatprep.subr.mxu0 0.0
    %128 = vmatpush1.msra.mxu0 0.0
    %129 = vmatprep.subr.mxu0 0.0
    %130 = vmatpush1.msra.mxu0 0.0
    %131 = vmatprep.subr.mxu0 0.0
    %132 = vmatpush1.msra.mxu0 0.0
    %133 = vmatprep.subr.mxu0 0.0
    %134 = vmatpush1.msra.mxu0 0.0
    %135 = vmatprep.subr.mxu0 0.0
    %136 = vmatpush1.msra.mxu0 0.0
    %137 = vmatprep.subr.mxu0 0.0
    %138 = vmatpush1.msra.mxu0 0.0
    %139 = vmatprep.subr.mxu0 0.0
    %140 = vmatpush1.msra.mxu0 0.0
    %141 = vmatprep.subr.mxu0 0.0
    %142 = vmatpush1.msra.mxu0 %v102
    %143 = vmatprep.subr.mxu0 0.0
    %144 = vmatpush1.msra.mxu0 %v101
    %145 = vmatprep.subr.mxu0 0.0
    %146 = vmatpush2.msra.mxu0 0.0
    %147 = vmatprep.subr.mxu0 0.0
    %148 = vmatpush2.msra.mxu0 0.0
    %149 = vmatprep.subr.mxu0 0.0
    %150 = vmatpush2.msra.mxu0 0.0
    %151 = vmatprep.subr.mxu0 0.0
    %152 = vmatpush2.msra.mxu0 0.0
    %153 = vmatprep.subr.mxu0 0.0
    %154 = vmatpush2.msra.mxu0 0.0
    %155 = vmatprep.subr.mxu0 0.0
    %156 = vmatpush2.msra.mxu0 0.0
    %157 = vmatprep.subr.mxu0 0.0
    %158 = vmatpush2.msra.mxu0 0.0
    %159 = vmatprep.subr.mxu0 0.0
    %160 = vmatpush2.msra.mxu0 0.0
    %161 = vmatprep.subr.mxu0 0.0
    %162 = vmatpush2.msra.mxu0 0.0
    %163 = vmatprep.subr.mxu0 0.0
    %164 = vmatpush2.msra.mxu0 0.0
    %165 = vmatprep.subr.mxu0 0.0
    %166 = vmatpush2.msra.mxu0 0.0
    %167 = vmatprep.subr.mxu0 0.0
    %168 = vmatpush2.msra.mxu0 0.0
    %169 = vmatprep.subr.mxu0 0.0
    %170 = vmatpush2.msra.mxu0 0.0
    %171 = vmatprep.subr.mxu0 0.0
    %172 = vmatpush2.msra.mxu0 0.0
    %173 = vmatprep.subr.mxu0 0.0
    %174 = vmatpush2.msra.mxu0 0.0
    %175 = vmatprep.subr.mxu0 0.0
    %176 = vmatpush2.msra.mxu0 0.0
    %177 = vmatprep.mubr.f32.mxu0 0.0
    %178 = vmatmul.mubr.f32.gmra.mxu0 %v111
    %v179 = vpop.f32.mrf.mxu0
    %v180 = vadd.f32 %v107, %v179
    %v181 = vpop.f32.mrf.mxu0
    %182 = vdwg.mxu0
    %v183 = vld [vmem:[#allocation10] sm:$0xff]
    %v184 = vld [vmem:[#allocation10 + $0x8] sm:$0xff]
    %v185 = vld [vmem:[#allocation10 + $0x18] sm:$0xff]
    %v186 = vld [vmem:[#allocation10 + $0x20] sm:$0xff]
    %v187 = vld [vmem:[#allocation10 + $0x30] sm:$0xff]
    %v188 = vld [vmem:[#allocation10 + $0x38] sm:$0xff]
    %v189 = vld [vmem:[#allocation10 + $0x48] sm:$0xff]
    %v190 = vld [vmem:[#allocation10 + $0x50] sm:$0xff]
    %199 = vrot.lane.b32.xlu0 %v183, 88
    %v200 = vpop.permute.xlu0 %199
    %201 = vrot.lane.b32.xlu0 %v184, 88
    %v202 = vpop.permute.xlu0 %201
    %203 = vrot.lane.b32.xlu0 %v185, 88
    %v204 = vpop.permute.xlu0 %203
    %205 = vrot.lane.b32.xlu0 %v186, 88
    %v206 = vpop.permute.xlu0 %205
    %207 = vrot.lane.b32.xlu0 %v187, 88
    %v208 = vpop.permute.xlu0 %207
    %209 = vrot.lane.b32.xlu0 %v188, 88
    %v210 = vpop.permute.xlu0 %209
    %211 = vrot.lane.b32.xlu0 %v189, 88
    %v212 = vpop.permute.xlu0 %211
    %213 = vrot.lane.b32.xlu0 %v190, 88
    %v214 = vpop.permute.xlu0 %213
    %vm215 = vcmask 719872
    %v216 = vsel %vm215, %v200, %v202
    %v217 = vsel %vm215, %v204, %v206
    %v218 = vsel %vm215, %v208, %v210
    %v219 = vsel %vm215, %v212, %v214
    %vm224 = vcmask 261120
    %v226 = vsel %vm224, %v89, 0
    %228 = vmatprep.subr.mxu0 0.0
    %229 = vmatpush1.msra.mxu0 0.0
    %230 = vmatprep.subr.mxu0 0.0
    %231 = vmatpush1.msra.mxu0 0.0
    %232 = vmatprep.subr.mxu0 0.0
    %233 = vmatpush1.msra.mxu0 0.0
    %234 = vmatprep.subr.mxu0 0.0
    %235 = vmatpush1.msra.mxu0 0.0
    %236 = vmatprep.subr.mxu0 0.0
    %237 = vmatpush1.msra.mxu0 0.0
    %238 = vmatprep.subr.mxu0 0.0
    %239 = vmatpush1.msra.mxu0 0.0
    %240 = vmatprep.subr.mxu0 0.0
    %241 = vmatpush1.msra.mxu0 0.0
    %242 = vmatprep.subr.mxu0 0.0
    %243 = vmatpush1.msra.mxu0 0.0
    %244 = vmatprep.subr.mxu0 0.0
    %245 = vmatpush1.msra.mxu0 0.0
    %246 = vmatprep.subr.mxu0 0.0
    %247 = vmatpush1.msra.mxu0 0.0
    %248 = vmatprep.subr.mxu0 0.0
    %249 = vmatpush1.msra.mxu0 0.0
    %250 = vmatprep.subr.mxu0 0.0
    %251 = vmatpush1.msra.mxu0 0.0
    %252 = vmatprep.subr.mxu0 0.0
    %253 = vmatpush1.msra.mxu0 %v219
    %254 = vmatprep.subr.mxu0 0.0
    %255 = vmatpush1.msra.mxu0 %v218
    %256 = vmatprep.subr.mxu0 0.0
    %257 = vmatpush1.msra.mxu0 %v217
    %258 = vmatprep.subr.mxu0 0.0
    %259 = vmatpush1.msra.mxu0 %v216
    %260 = vmatprep.subr.mxu0 0.0
    %261 = vmatpush2.msra.mxu0 0.0
    %262 = vmatprep.subr.mxu0 0.0
    %263 = vmatpush2.msra.mxu0 0.0
    %264 = vmatprep.subr.mxu0 0.0
    %265 = vmatpush2.msra.mxu0 0.0
    %266 = vmatprep.subr.mxu0 0.0
    %267 = vmatpush2.msra.mxu0 0.0
    %268 = vmatprep.subr.mxu0 0.0
    %269 = vmatpush2.msra.mxu0 0.0
    %270 = vmatprep.subr.mxu0 0.0
    %271 = vmatpush2.msra.mxu0 0.0
    %272 = vmatprep.subr.mxu0 0.0
    %273 = vmatpush2.msra.mxu0 0.0
    %274 = vmatprep.subr.mxu0 0.0
    %275 = vmatpush2.msra.mxu0 0.0
    %276 = vmatprep.subr.mxu0 0.0
    %277 = vmatpush2.msra.mxu0 0.0
    %278 = vmatprep.subr.mxu0 0.0
    %279 = vmatpush2.msra.mxu0 0.0
    %280 = vmatprep.subr.mxu0 0.0
    %281 = vmatpush2.msra.mxu0 0.0
    %282 = vmatprep.subr.mxu0 0.0
    %283 = vmatpush2.msra.mxu0 0.0
    %284 = vmatprep.subr.mxu0 0.0
    %285 = vmatpush2.msra.mxu0 0.0
    %286 = vmatprep.subr.mxu0 0.0
    %287 = vmatpush2.msra.mxu0 0.0
    %288 = vmatprep.subr.mxu0 0.0
    %289 = vmatpush2.msra.mxu0 0.0
    %290 = vmatprep.subr.mxu0 0.0
    %291 = vmatpush2.msra.mxu0 0.0
    %292 = vmatprep.mubr.f32.mxu0 0.0
    %293 = vmatmul.mubr.f32.gmra.mxu0 %v226
    %v294 = vpop.f32.mrf.mxu0
    %v295 = vadd.f32 0.0, %v294
    %v296 = vpop.f32.mrf.mxu0
    %297 = vdwg.mxu0
    %v298 = vld [vmem:[#allocation10] sm:$0xff]
    %v299 = vld [vmem:[#allocation10 + $0x18] sm:$0xff]
    %v300 = vld [vmem:[#allocation10 + $0x30] sm:$0xff]
    %v301 = vld [vmem:[#allocation10 + $0x48] sm:$0xff]
    %v303 = vsel %vm224, %v180, 0
    %305 = vmatprep.subr.mxu0 0.0
    %306 = vmatpush1.msra.mxu0 0.0
    %307 = vmatprep.subr.mxu0 0.0
    %308 = vmatpush1.msra.mxu0 0.0
    %309 = vmatprep.subr.mxu0 0.0
    %310 = vmatpush1.msra.mxu0 0.0
    %311 = vmatprep.subr.mxu0 0.0
    %312 = vmatpush1.msra.mxu0 0.0
    %313 = vmatprep.subr.mxu0 0.0
    %314 = vmatpush1.msra.mxu0 0.0
    %315 = vmatprep.subr.mxu0 0.0
    %316 = vmatpush1.msra.mxu0 0.0
    %317 = vmatprep.subr.mxu0 0.0
    %318 = vmatpush1.msra.mxu0 0.0
    %319 = vmatprep.subr.mxu0 0.0
    %320 = vmatpush1.msra.mxu0 0.0
    %321 = vmatprep.subr.mxu0 0.0
    %322 = vmatpush1.msra.mxu0 0.0
    %323 = vmatprep.subr.mxu0 0.0
    %324 = vmatpush1.msra.mxu0 0.0
    %325 = vmatprep.subr.mxu0 0.0
    %326 = vmatpush1.msra.mxu0 0.0
    %327 = vmatprep.subr.mxu0 0.0
    %328 = vmatpush1.msra.mxu0 0.0
    %329 = vmatprep.subr.mxu0 0.0
    %330 = vmatpush1.msra.mxu0 %v301
    %331 = vmatprep.subr.mxu0 0.0
    %332 = vmatpush1.msra.mxu0 %v300
    %333 = vmatprep.subr.mxu0 0.0
    %334 = vmatpush1.msra.mxu0 %v299
    %335 = vmatprep.subr.mxu0 0.0
    %336 = vmatpush1.msra.mxu0 %v298
    %337 = vmatprep.subr.mxu0 0.0
    %338 = vmatpush2.msra.mxu0 0.0
    %339 = vmatprep.subr.mxu0 0.0
    %340 = vmatpush2.msra.mxu0 0.0
    %341 = vmatprep.subr.mxu0 0.0
    %342 = vmatpush2.msra.mxu0 0.0
    %343 = vmatprep.subr.mxu0 0.0
    %344 = vmatpush2.msra.mxu0 0.0
    %345 = vmatprep.subr.mxu0 0.0
    %346 = vmatpush2.msra.mxu0 0.0
    %347 = vmatprep.subr.mxu0 0.0
    %348 = vmatpush2.msra.mxu0 0.0
    %349 = vmatprep.subr.mxu0 0.0
    %350 = vmatpush2.msra.mxu0 0.0
    %351 = vmatprep.subr.mxu0 0.0
    %352 = vmatpush2.msra.mxu0 0.0
    %353 = vmatprep.subr.mxu0 0.0
    %354 = vmatpush2.msra.mxu0 0.0
    %355 = vmatprep.subr.mxu0 0.0
    %356 = vmatpush2.msra.mxu0 0.0
    %357 = vmatprep.subr.mxu0 0.0
    %358 = vmatpush2.msra.mxu0 0.0
    %359 = vmatprep.subr.mxu0 0.0
    %360 = vmatpush2.msra.mxu0 0.0
    %361 = vmatprep.subr.mxu0 0.0
    %362 = vmatpush2.msra.mxu0 0.0
    %363 = vmatprep.subr.mxu0 0.0
    %364 = vmatpush2.msra.mxu0 0.0
    %365 = vmatprep.subr.mxu0 0.0
    %366 = vmatpush2.msra.mxu0 0.0
    %367 = vmatprep.subr.mxu0 0.0
    %368 = vmatpush2.msra.mxu0 0.0
    %369 = vmatprep.mubr.f32.mxu0 0.0
    %370 = vmatmul.mubr.f32.gmra.mxu0 %v303
    %v371 = vpop.f32.mrf.mxu0
    %v372 = vadd.f32 0.0, %v371
    %v373 = vpop.f32.mrf.mxu0
    %374 = vdwg.mxu0
    %v375 = vadd.f32 %v372, %v295
    %376 = vrot.lane.b32.xlu0 %v107, 96
    %v377 = vpop.permute.xlu0 %376
    %v379 = vadd.f32 %v375, %v377
    %vm380 = vcmask 58368
    %v381 = vsel %vm380, %v379, -inf
    %382 = vmax.xlane.f32.xlu0 %v381
    %v383 = vpop.xlane.xlu0 %382
    %v384 = vsub.f32 %v379, %v383
    %v385 = vmul.f32 %v384, 1.442695
    %v386 = vpow.pop %v385
    %v387 = vsel %vm380, %v386, 0.0
    %388 = vadd.xlane.f32.xlu0 %v387
    %v389 = vpop.xlane.xlu0 %388
    %v390 = vrcp.pop %v389
    %v391 = vmul.f32 %v386, %v390
    %392 = vxpose.xlu0.b32.start [1/16] %v391, 128
    %393 = vxpose.xlu0.b32.cont [2/16] 0.0, 128
    %394 = vxpose.xlu0.b32.cont [3/16] 0.0, 128
    %395 = vxpose.xlu0.b32.cont [4/16] 0.0, 128
    %396 = vxpose.xlu0.b32.cont [5/16] 0.0, 128
    %397 = vxpose.xlu0.b32.cont [6/16] 0.0, 128
    %398 = vxpose.xlu0.b32.cont [7/16] 0.0, 128
    %399 = vxpose.xlu0.b32.cont [8/16] 0.0, 128
    %400 = vxpose.xlu0.b32.cont [9/16] 0.0, 128
    %401 = vxpose.xlu0.b32.cont [10/16] 0.0, 128
    %402 = vxpose.xlu0.b32.cont [11/16] 0.0, 128
    %403 = vxpose.xlu0.b32.cont [12/16] 0.0, 128
    %404 = vxpose.xlu0.b32.cont [13/16] 0.0, 128
    %405 = vxpose.xlu0.b32.cont [14/16] 0.0, 128
    %406 = vxpose.xlu0.b32.cont [15/16] 0.0, 128
    %407 = vxpose.xlu0.b32.end [16/16] 0.0, 128
    %v408 = vpop.trf.xlu0
    %v409 = vpop.trf.xlu0
    %v410 = vpop.trf.xlu0
    %v411 = vpop.trf.xlu0
    %v412 = vpop.trf.xlu0
    %v413 = vpop.trf.xlu0
    %v414 = vpop.trf.xlu0
    %v415 = vpop.trf.xlu0
    %v416 = vpop.trf.xlu0
    %v417 = vpop.trf.xlu0
    %v418 = vpop.trf.xlu0
    %v419 = vpop.trf.xlu0
    %v420 = vpop.trf.xlu0
    %v421 = vpop.trf.xlu0
    %v422 = vpop.trf.xlu0
    %v423 = vpop.trf.xlu0
    %v424 = vlaneseq
    %v425 = vshrl.u32 %v424, 7
    %v426 = vsub.s32 0, %v425
    %v427 = vrot.slane %v408, %v426
    %429 = vbcast.lane.b32.xlu0 %v427, 256
    %v430 = vpop.permute.xlu0 %429
    %v431 = vlaneseq
    %v432 = vshrl.u32 %v431, 7
    %v433 = vsub.s32 1, %v432
    %v434 = vrot.slane %v408, %v433
    %436 = vbcast.lane.b32.xlu0 %v434, 256
    %v437 = vpop.permute.xlu0 %436
    %v438 = vlaneseq
    %v439 = vshrl.u32 %v438, 7
    %v440 = vsub.s32 2, %v439
    %v441 = vrot.slane %v408, %v440
    %443 = vbcast.lane.b32.xlu0 %v441, 256
    %v444 = vpop.permute.xlu0 %443
    %v445 = vlaneseq
    %v446 = vshrl.u32 %v445, 7
    %v447 = vsub.s32 3, %v446
    %v448 = vrot.slane %v408, %v447
    %450 = vbcast.lane.b32.xlu0 %v448, 256
    %v451 = vpop.permute.xlu0 %450
    %v452 = vlaneseq
    %v453 = vshrl.u32 %v452, 7
    %v454 = vsub.s32 4, %v453
    %v455 = vrot.slane %v408, %v454
    %457 = vbcast.lane.b32.xlu0 %v455, 256
    %v458 = vpop.permute.xlu0 %457
    %v459 = vlaneseq
    %v460 = vshrl.u32 %v459, 7
    %v461 = vsub.s32 5, %v460
    %v462 = vrot.slane %v408, %v461
    %464 = vbcast.lane.b32.xlu0 %v462, 256
    %v465 = vpop.permute.xlu0 %464
    %v466 = vlaneseq
    %v467 = vshrl.u32 %v466, 7
    %v468 = vsub.s32 6, %v467
    %v469 = vrot.slane %v408, %v468
    %471 = vbcast.lane.b32.xlu0 %v469, 256
    %v472 = vpop.permute.xlu0 %471
    %v473 = vlaneseq
    %v474 = vshrl.u32 %v473, 7
    %v475 = vsub.s32 7, %v474
    %v476 = vrot.slane %v408, %v475
    %478 = vbcast.lane.b32.xlu0 %v476, 256
    %v479 = vpop.permute.xlu0 %478
    %v480 = vmul.f32 %v430, %v90
    %v481 = vmul.f32 %v437, %v91
    %v482 = vmul.f32 %v444, %v92
    %v483 = vmul.f32 %v451, %v93
    %v484 = vmul.f32 %v458, %v94
    %v485 = vmul.f32 %v465, %v95
    %v486 = vmul.f32 %v472, %v96
    %v487 = vmul.f32 %v479, %v97
    %vm488 = vcmask 254976
    %v489 = vsel %vm488, %v480, 0.0
    %v490 = vsel %vm488, %v481, 0.0
    %v491 = vadd.f32 %v489, %v490
    %v492 = vsel %vm488, %v482, 0.0
    %v493 = vadd.f32 %v491, %v492
    %v494 = vsel %vm488, %v483, 0.0
    %v495 = vadd.f32 %v493, %v494
    %v496 = vsel %vm488, %v484, 0.0
    %v497 = vadd.f32 %v495, %v496
    %v498 = vsel %vm488, %v485, 0.0
    %v499 = vadd.f32 %v497, %v498
    %v500 = vsel %vm488, %v486, 0.0
    %v501 = vadd.f32 %v499, %v500
    %v502 = vsel %vm488, %v487, 0.0
    %v503 = vadd.f32 %v501, %v502
    %v504 = vld [vmem:[#allocation10 + $0x8] sm:$0xff]
    %v505 = vld [vmem:[#allocation10 + $0x10] sm:$0xff]
    %v506 = vld [vmem:[#allocation10 + $0x20] sm:$0xff]
    %v507 = vld [vmem:[#allocation10 + $0x28] sm:$0xff]
    %v508 = vld [vmem:[#allocation10 + $0x38] sm:$0xff]
    %v509 = vld [vmem:[#allocation10 + $0x40] sm:$0xff]
    %v510 = vld [vmem:[#allocation10 + $0x50] sm:$0xff]
    %v511 = vld [vmem:[#allocation10 + $0x58] sm:$0xff]
    %520 = vrot.lane.b32.xlu0 %v504, 16
    %v521 = vpop.permute.xlu0 %520
    %522 = vrot.lane.b32.xlu0 %v505, 16
    %v523 = vpop.permute.xlu0 %522
    %524 = vrot.lane.b32.xlu0 %v506, 16
    %v525 = vpop.permute.xlu0 %524
    %526 = vrot.lane.b32.xlu0 %v507, 16
    %v527 = vpop.permute.xlu0 %526
    %528 = vrot.lane.b32.xlu0 %v508, 16
    %v529 = vpop.permute.xlu0 %528
    %530 = vrot.lane.b32.xlu0 %v509, 16
    %v531 = vpop.permute.xlu0 %530
    %532 = vrot.lane.b32.xlu0 %v510, 16
    %v533 = vpop.permute.xlu0 %532
    %534 = vrot.lane.b32.xlu0 %v511, 16
    %v535 = vpop.permute.xlu0 %534
    %v536 = vsel %vm109, %v521, %v523
    %v537 = vsel %vm109, %v525, %v527
    %v538 = vsel %vm109, %v529, %v531
    %v539 = vsel %vm109, %v533, %v535
    %v545 = vsel %vm224, %v503, 0
    %547 = vmatprep.subr.mxu0 0.0
    %548 = vmatpush1.msra.mxu0 0.0
    %549 = vmatprep.subr.mxu0 0.0
    %550 = vmatpush1.msra.mxu0 0.0
    %551 = vmatprep.subr.mxu0 0.0
    %552 = vmatpush1.msra.mxu0 0.0
    %553 = vmatprep.subr.mxu0 0.0
    %554 = vmatpush1.msra.mxu0 0.0
    %555 = vmatprep.subr.mxu0 0.0
    %556 = vmatpush1.msra.mxu0 0.0
    %557 = vmatprep.subr.mxu0 0.0
    %558 = vmatpush1.msra.mxu0 0.0
    %559 = vmatprep.subr.mxu0 0.0
    %560 = vmatpush1.msra.mxu0 0.0
    %561 = vmatprep.subr.mxu0 0.0
    %562 = vmatpush1.msra.mxu0 0.0
    %563 = vmatprep.subr.mxu0 0.0
    %564 = vmatpush1.msra.mxu0 0.0
    %565 = vmatprep.subr.mxu0 0.0
    %566 = vmatpush1.msra.mxu0 0.0
    %567 = vmatprep.subr.mxu0 0.0
    %568 = vmatpush1.msra.mxu0 0.0
    %569 = vmatprep.subr.mxu0 0.0
    %570 = vmatpush1.msra.mxu0 0.0
    %571 = vmatprep.subr.mxu0 0.0
    %572 = vmatpush1.msra.mxu0 %v539
    %573 = vmatprep.subr.mxu0 0.0
    %574 = vmatpush1.msra.mxu0 %v538
    %575 = vmatprep.subr.mxu0 0.0
    %576 = vmatpush1.msra.mxu0 %v537
    %577 = vmatprep.subr.mxu0 0.0
    %578 = vmatpush1.msra.mxu0 %v536
    %579 = vmatprep.subr.mxu0 0.0
    %580 = vmatpush2.msra.mxu0 0.0
    %581 = vmatprep.subr.mxu0 0.0
    %582 = vmatpush2.msra.mxu0 0.0
    %583 = vmatprep.subr.mxu0 0.0
    %584 = vmatpush2.msra.mxu0 0.0
    %585 = vmatprep.subr.mxu0 0.0
    %586 = vmatpush2.msra.mxu0 0.0
    %587 = vmatprep.subr.mxu0 0.0
    %588 = vmatpush2.msra.mxu0 0.0
    %589 = vmatprep.subr.mxu0 0.0
    %590 = vmatpush2.msra.mxu0 0.0
    %591 = vmatprep.subr.mxu0 0.0
    %592 = vmatpush2.msra.mxu0 0.0
    %593 = vmatprep.subr.mxu0 0.0
    %594 = vmatpush2.msra.mxu0 0.0
    %595 = vmatprep.subr.mxu0 0.0
    %596 = vmatpush2.msra.mxu0 0.0
    %597 = vmatprep.subr.mxu0 0.0
    %598 = vmatpush2.msra.mxu0 0.0
    %599 = vmatprep.subr.mxu0 0.0
    %600 = vmatpush2.msra.mxu0 0.0
    %601 = vmatprep.subr.mxu0 0.0
    %602 = vmatpush2.msra.mxu0 0.0
    %603 = vmatprep.subr.mxu0 0.0
    %604 = vmatpush2.msra.mxu0 0.0
    %605 = vmatprep.subr.mxu0 0.0
    %606 = vmatpush2.msra.mxu0 0.0
    %607 = vmatprep.subr.mxu0 0.0
    %608 = vmatpush2.msra.mxu0 0.0
    %609 = vmatprep.subr.mxu0 0.0
    %610 = vmatpush2.msra.mxu0 0.0
    %611 = vmatprep.mubr.f32.mxu0 0.0
    %612 = vmatmul.mubr.f32.gmra.mxu0 %v545
    %v613 = vpop.f32.mrf.mxu0
    %v614 = vadd.f32 0.0, %v613
    %v615 = vpop.f32.mrf.mxu0
    %616 = vdwg.mxu0
    %618 = vrot.lane.b32.xlu0 %v614, 8
    %v619 = vpop.permute.xlu0 %618
    %v621 = vadd.f32 %v372, %v619
    %v622 = vadd.f32 %v621, %v377
    %v623 = vmax.f32 %v622, 0.0
    %625 = vrot.lane.b32.xlu0 %v623, 120
    %v626 = vpop.permute.xlu0 %625
    %627 = vrot.lane.b32.xlu0 %v184, 112
    %v628 = vpop.permute.xlu0 %627
    %629 = vrot.lane.b32.xlu0 %v186, 112
    %v630 = vpop.permute.xlu0 %629
    %631 = vrot.lane.b32.xlu0 %v188, 112
    %v632 = vpop.permute.xlu0 %631
    %633 = vrot.lane.b32.xlu0 %v190, 112
    %v634 = vpop.permute.xlu0 %633
    %v639 = vsel %vm224, %v626, 0
    %641 = vmatprep.subr.mxu0 0.0
    %642 = vmatpush1.msra.mxu0 0.0
    %643 = vmatprep.subr.mxu0 0.0
    %644 = vmatpush1.msra.mxu0 0.0
    %645 = vmatprep.subr.mxu0 0.0
    %646 = vmatpush1.msra.mxu0 0.0
    %647 = vmatprep.subr.mxu0 0.0
    %648 = vmatpush1.msra.mxu0 0.0
    %649 = vmatprep.subr.mxu0 0.0
    %650 = vmatpush1.msra.mxu0 0.0
    %651 = vmatprep.subr.mxu0 0.0
    %652 = vmatpush1.msra.mxu0 0.0
    %653 = vmatprep.subr.mxu0 0.0
    %654 = vmatpush1.msra.mxu0 0.0
    %655 = vmatprep.subr.mxu0 0.0
    %656 = vmatpush1.msra.mxu0 0.0
    %657 = vmatprep.subr.mxu0 0.0
    %658 = vmatpush1.msra.mxu0 0.0
    %659 = vmatprep.subr.mxu0 0.0
    %660 = vmatpush1.msra.mxu0 0.0
    %661 = vmatprep.subr.mxu0 0.0
    %662 = vmatpush1.msra.mxu0 0.0
    %663 = vmatprep.subr.mxu0 0.0
    %664 = vmatpush1.msra.mxu0 0.0
    %665 = vmatprep.subr.mxu0 0.0
    %666 = vmatpush1.msra.mxu0 %v634
    %667 = vmatprep.subr.mxu0 0.0
    %668 = vmatpush1.msra.mxu0 %v632
    %669 = vmatprep.subr.mxu0 0.0
    %670 = vmatpush1.msra.mxu0 %v630
    %671 = vmatprep.subr.mxu0 0.0
    %672 = vmatpush1.msra.mxu0 %v628
    %673 = vmatprep.subr.mxu0 0.0
    %674 = vmatpush2.msra.mxu0 0.0
    %675 = vmatprep.subr.mxu0 0.0
    %676 = vmatpush2.msra.mxu0 0.0
    %677 = vmatprep.subr.mxu0 0.0
    %678 = vmatpush2.msra.mxu0 0.0
    %679 = vmatprep.subr.mxu0 0.0
    %680 = vmatpush2.msra.mxu0 0.0
    %681 = vmatprep.subr.mxu0 0.0
    %682 = vmatpush2.msra.mxu0 0.0
    %683 = vmatprep.subr.mxu0 0.0
    %684 = vmatpush2.msra.mxu0 0.0
    %685 = vmatprep.subr.mxu0 0.0
    %686 = vmatpush2.msra.mxu0 0.0
    %687 = vmatprep.subr.mxu0 0.0
    %688 = vmatpush2.msra.mxu0 0.0
    %689 = vmatprep.subr.mxu0 0.0
    %690 = vmatpush2.msra.mxu0 0.0
    %691 = vmatprep.subr.mxu0 0.0
    %692 = vmatpush2.msra.mxu0 0.0
    %693 = vmatprep.subr.mxu0 0.0
    %694 = vmatpush2.msra.mxu0 0.0
    %695 = vmatprep.subr.mxu0 0.0
    %696 = vmatpush2.msra.mxu0 0.0
    %697 = vmatprep.subr.mxu0 0.0
    %698 = vmatpush2.msra.mxu0 0.0
    %699 = vmatprep.subr.mxu0 0.0
    %700 = vmatpush2.msra.mxu0 0.0
    %701 = vmatprep.subr.mxu0 0.0
    %702 = vmatpush2.msra.mxu0 0.0
    %703 = vmatprep.subr.mxu0 0.0
    %704 = vmatpush2.msra.mxu0 0.0
    %705 = vmatprep.mubr.f32.mxu0 0.0
    %706 = vmatmul.mubr.f32.gmra.mxu0 %v639
    %v707 = vpop.f32.mrf.mxu0
    %v708 = vadd.f32 0.0, %v707
    %v709 = vpop.f32.mrf.mxu0
    %710 = vdwg.mxu0
    %712 = vrot.lane.b32.xlu0 %v295, 120
    %v713 = vpop.permute.xlu0 %712
    %v715 = vadd.f32 %v708, %v713
    %716 = vrot.lane.b32.xlu0 %v107, 56
    %v717 = vpop.permute.xlu0 %716
    %v719 = vadd.f32 %v715, %v717
    %v720 = vxor.u32 %v719, 2147483648
    %v721 = vmul.f32 %v720, 1.442695
    %v722 = vpow.pop %v721
    %v723 = vadd.f32 %v722, 1.0
    %v724 = vrcp.pop %v723
    %v725 = vmul.f32 1.0, %v724
    %v727 = vlaneseq
    %v728 = vshrl.u32 %v727, 7
    %v729 = vsub.s32 0, %v728
    %v730 = vrot.slane %v99, %v729
    %v731 = vlaneseq
    %v732 = vshrl.u32 %v731, 7
    %v733 = vsub.s32 1, %v732
    %v734 = vrot.slane %v99, %v733
    %735 = vrot.lane.b32.xlu0 %v730, 56
    %v736 = vpop.permute.xlu0 %735
    %737 = vrot.lane.b32.xlu0 %v734, 56
    %v738 = vpop.permute.xlu0 %737
    %vm739 = vcmask 457728
    %v740 = vsel %vm739, %v736, %v738
    %v742 = vadd.f32 %v715, %v740
    %v743 = vxor.u32 %v742, 2147483648
    %v744 = vmul.f32 %v743, 1.442695
    %v745 = vpow.pop %v744
    %v746 = vadd.f32 %v745, 1.0
    %v747 = vrcp.pop %v746
    %v748 = vmul.f32 1.0, %v747
    %v750 = vlaneseq
    %v751 = vshrl.u32 %v750, 7
    %v752 = vsub.s32 0, %v751
    %v753 = vrot.slane %v100, %v752
    %754 = vrot.lane.b32.xlu0 %v753, 56
    %v755 = vpop.permute.xlu0 %754
    %v757 = vadd.f32 %v708, %v755
    %758 = vrot.lane.b32.xlu0 %v753, 32
    %v759 = vpop.permute.xlu0 %758
    %v761 = vadd.f32 %v295, %v759
    %763 = vrot.lane.b32.xlu0 %v761, 56
    %v764 = vpop.permute.xlu0 %763
    %v766 = vmul.f32 %v725, %v764
    %768 = vrot.lane.b32.xlu0 %v766, 64
    %v769 = vpop.permute.xlu0 %768
    %v771 = vadd.f32 %v757, %v769
    %v772 = vtanh.pop %v771
    %v773 = vsub.f32 1.0, %v748
    %775 = vrot.lane.b32.xlu0 %v772, 96
    %v776 = vpop.permute.xlu0 %775
    %v778 = vmul.f32 %v773, %v776
    %779 = vrot.lane.b32.xlu0 %v89, 32
    %v780 = vpop.permute.xlu0 %779
    %v782 = vmul.f32 %v748, %v780
    %v783 = vadd.f32 %v778, %v782
    %785 = vrot.lane.b32.xlu0 %v783, 96
    %v786 = vpop.permute.xlu0 %785
    %787 = vrot.lane.b32.xlu0 %v505, 112
    %v788 = vpop.permute.xlu0 %787
    %789 = vrot.lane.b32.xlu0 %v507, 112
    %v790 = vpop.permute.xlu0 %789
    %791 = vrot.lane.b32.xlu0 %v509, 112
    %v792 = vpop.permute.xlu0 %791
    %793 = vrot.lane.b32.xlu0 %v511, 112
    %v794 = vpop.permute.xlu0 %793
    %v799 = vsel %vm224, %v786, 0
    %801 = vmatprep.subr.mxu0 0.0
    %802 = vmatpush1.msra.mxu0 0.0
    %803 = vmatprep.subr.mxu0 0.0
    %804 = vmatpush1.msra.mxu0 0.0
    %805 = vmatprep.subr.mxu0 0.0
    %806 = vmatpush1.msra.mxu0 0.0
    %807 = vmatprep.subr.mxu0 0.0
    %808 = vmatpush1.msra.mxu0 0.0
    %809 = vmatprep.subr.mxu0 0.0
    %810 = vmatpush1.msra.mxu0 0.0
    %811 = vmatprep.subr.mxu0 0.0
    %812 = vmatpush1.msra.mxu0 0.0
    %813 = vmatprep.subr.mxu0 0.0
    %814 = vmatpush1.msra.mxu0 0.0
    %815 = vmatprep.subr.mxu0 0.0
    %816 = vmatpush1.msra.mxu0 0.0
    %817 = vmatprep.subr.mxu0 0.0
    %818 = vmatpush1.msra.mxu0 0.0
    %819 = vmatprep.subr.mxu0 0.0
    %820 = vmatpush1.msra.mxu0 0.0
    %821 = vmatprep.subr.mxu0 0.0
    %822 = vmatpush1.msra.mxu0 0.0
    %823 = vmatprep.subr.mxu0 0.0
    %824 = vmatpush1.msra.mxu0 0.0
    %825 = vmatprep.subr.mxu0 0.0
    %826 = vmatpush1.msra.mxu0 %v794
    %827 = vmatprep.subr.mxu0 0.0
    %828 = vmatpush1.msra.mxu0 %v792
    %829 = vmatprep.subr.mxu0 0.0
    %830 = vmatpush1.msra.mxu0 %v790
    %831 = vmatprep.subr.mxu0 0.0
    %832 = vmatpush1.msra.mxu0 %v788
    %833 = vmatprep.subr.mxu0 0.0
    %834 = vmatpush2.msra.mxu0 0.0
    %835 = vmatprep.subr.mxu0 0.0
    %836 = vmatpush2.msra.mxu0 0.0
    %837 = vmatprep.subr.mxu0 0.0
    %838 = vmatpush2.msra.mxu0 0.0
    %839 = vmatprep.subr.mxu0 0.0
    %840 = vmatpush2.msra.mxu0 0.0
    %841 = vmatprep.subr.mxu0 0.0
    %842 = vmatpush2.msra.mxu0 0.0
    %843 = vmatprep.subr.mxu0 0.0
    %844 = vmatpush2.msra.mxu0 0.0
    %845 = vmatprep.subr.mxu0 0.0
    %846 = vmatpush2.msra.mxu0 0.0
    %847 = vmatprep.subr.mxu0 0.0
    %848 = vmatpush2.msra.mxu0 0.0
    %849 = vmatprep.subr.mxu0 0.0
    %850 = vmatpush2.msra.mxu0 0.0
    %851 = vmatprep.subr.mxu0 0.0
    %852 = vmatpush2.msra.mxu0 0.0
    %853 = vmatprep.subr.mxu0 0.0
    %854 = vmatpush2.msra.mxu0 0.0
    %855 = vmatprep.subr.mxu0 0.0
    %856 = vmatpush2.msra.mxu0 0.0
    %857 = vmatprep.subr.mxu0 0.0
    %858 = vmatpush2.msra.mxu0 0.0
    %859 = vmatprep.subr.mxu0 0.0
    %860 = vmatpush2.msra.mxu0 0.0
    %861 = vmatprep.subr.mxu0 0.0
    %862 = vmatpush2.msra.mxu0 0.0
    %863 = vmatprep.subr.mxu0 0.0
    %864 = vmatpush2.msra.mxu0 0.0
    %865 = vmatprep.mubr.f32.mxu0 0.0
    %866 = vmatmul.mubr.f32.gmra.mxu0 %v799
    %v867 = vpop.f32.mrf.mxu0
    %v868 = vadd.f32 %v755, %v867
    %v869 = vpop.f32.mrf.mxu0
    %870 = vdwg.mxu0
    %vm871 = vcmask 123904
    %872 = vst.msk [vmem:[#allocation11] sm:$0x3] %vm871, %v868
    %873 = vrot.lane.b32.xlu0 %v783, 112
    %v874 = vpop.permute.xlu0 %873
    %vm876 = vcmask 386176
    %877 = vst.msk [vmem:[#allocation11] sm:$0x3] %vm876, %v874
    %879 = vrot.lane.b32.xlu0 %v391, 48
    %v880 = vpop.permute.xlu0 %879
    %vm882 = vcmask 451968
    %883 = vst.msk [vmem:[#allocation11] sm:$0x3] %vm882, %v880
    %vm884 = vcmask 1041856
    %885 = vst.msk [vmem:[#allocation11] sm:$0x3] %vm884, 0.0
    // Predicated region
    $region46: #{tpu_custom_call.1} parent=1 // pred_check
      _
    $region47: #{tpu_custom_call.1} parent=1 // pred_check_branch
      %887 = sbr.rel (0) target = $region49
    $region48: #{tpu_custom_call.1} parent=1 // pred_region
      %s889 = ssub.s32 32, 32
      %890 = vsyncadd [#allocation4], %s889
      %s892 = sshll.u32 [#allocation11], 4
      %s893 = int_to_ptr.vmem [resolvable:$true] %s892
      %895 = dma.vmem_to_hbm [thread:$0]  %s893, 32, %s6, [#allocation4]
    $region49: #{tpu_custom_call.1} parent=1 // pred_fallthru
      _
    // Predicated region
    $region50: #{tpu_custom_call.1} parent=1 // pred_check
      _
    $region51: #{tpu_custom_call.1} parent=1 // pred_check_branch
      %897 = sbr.rel (0) target = $region53
    $region52: #{tpu_custom_call.1} parent=1 // pred_region
      %898 = dma.done [#allocation4], 32
    $region53: #{tpu_custom_call.1} parent=1 // pred_fallthru
      _
    %899 = vsyncpa [#allocation3], 1
    %900 = vsyncpa [#allocation6], 1
    %901 = vsyncpa [#allocation9], 1
    %902 = vsyncpa [#allocation4], 1

</llo_original>
